<compile_context>
chip_gen: v5e
topology: v5e:2x2
jax: 0.10.0
libtpu: 0.0.40
codegen_flags: <defaults>
</compile_context>

<pallas_src>
import jax
import jax.numpy as jnp
from jax.experimental import pallas as pl
from jax.experimental.pallas import tpu as pltpu


def _cdiv(a, b):
    return -(-a // b)


def _round_up(n, m):
    return _cdiv(n, m) * m


def ffw_kernel(x_ref, w1_ref, b1_ref, w2_ref, b2_ref, o_ref):
    x = x_ref[...]  # model dtype (bf16 or f32) -> full-rate MXU
    # fc1 (+bias, f32 accumulate) + ReLU.  dropout1 == identity in eval mode.
    h = jnp.dot(x, w1_ref[...], preferred_element_type=jnp.float32)
    h = jnp.maximum(h + b1_ref[...], 0.0).astype(x.dtype)
    # fc2 (+bias, f32 accumulate).  dropout2 == identity in eval mode.
    y = jnp.dot(h, w2_ref[...], preferred_element_type=jnp.float32)
    y = (y + b2_ref[...]).astype(o_ref.dtype)
    # Residual in the model dtype (PyTorch: outputs += x), single downcast.
    o_ref[...] = y + x
    # TODO(synk): training-mode dropout (pltpu.prng_random_bits mask) omitted;
    # eval-mode dropout is the identity, matching module.eval() semantics.


def prepare_ffw_params(w1, b1, w2, b2, dtype=None):
    """One-time parameter prep (hoisted out of the per-call path).

    w1, w2: nn.Linear weights of shape (H_out, H_in); b1, b2: (H,).
    Transposes weights to (in, out) for `x @ W` and keeps biases as f32 rows.
    For bf16 inference (halves HBM streaming, matters most on v5e) pass
    dtype=jnp.bfloat16 and feed a bf16 x to ffw_unoff.
    """
    dt = dtype if dtype is not None else w1.dtype
    return (
        jnp.asarray(w1, dt).T,
        jnp.asarray(b1, jnp.float32).reshape(1, -1),
        jnp.asarray(w2, dt).T,
        jnp.asarray(b2, jnp.float32).reshape(1, -1),
    )


def _vmem_limit_bytes():
    default_cap = 64 * 1024 * 1024
    try:
        cap = int(getattr(pltpu.get_tpu_info(), "vmem_capacity_bytes", default_cap))
    except Exception:
        cap = default_cap
    # Headroom for compiler-internal scratch; ~48 MiB on v7x, ~96 MiB on v5e/v6e.
    return int(min(100 * 1024 * 1024, (cap * 3) // 4))


def _pick_row_tile(N, H, act_itemsize, w_itemsize, vmem_limit):
    # Per-row VMEM cost: double-buffered input + output activation blocks
    # (2 + 2 buffers) plus ~3 full-tile f32 temporaries the compiler may
    # materialize for large tiles.
    per_row = 4 * H * act_itemsize + 3 * H * 4
    # Resident params, worst case (double-buffered if Buffered(1) falls back).
    param_bytes = 2 * (2 * H * H * w_itemsize) + 2 * (2 * H * 4)
    budget = max(1 << 20, vmem_limit - param_bytes - (4 << 20))
    rt_vmem = max(8, (budget // per_row) // 8 * 8)
    # Stream ~4 MiB per activation buffer to sit near the HBM roofline.
    rt_bw = max(8, ((4 << 20) // max(1, H * act_itemsize)) // 8 * 8)
    # Keep >= 4 grid steps so ('parallel',) can shard rows across both v7x TCs.
    rt_grid = max(8, _round_up(_cdiv(N, 4), 8))
    return max(8, min(rt_vmem, rt_bw, rt_grid, _round_up(N, 8)))


def ffw_unoff(x, params, *, row_tile=None):
    """x: (B, S, H); params from prepare_ffw_params().  Returns (B, S, H)."""
    B, S, H = x.shape
    N = B * S
    w1t, b1r, w2t, b2r = params
    assert w1t.shape == (H, H) and w2t.shape == (H, H)

    xr = x.reshape(N, H)  # free view, no HBM copy
    act_isz = jnp.dtype(x.dtype).itemsize
    w_isz = jnp.dtype(w1t.dtype).itemsize
    vmem_limit = _vmem_limit_bytes()
    rt = int(row_tile) if row_tile else _pick_row_tile(N, H, act_isz, w_isz, vmem_limit)
    grid = (_cdiv(N, rt),)
    # TODO(synk): for very large H (2*H*H*itemsize approaching the VMEM budget,
    # ~2K bf16 on v7x) add a hidden-dim 'arbitrary' grid axis with an f32
    # accumulator instead of keeping both weights fully resident.

    def _build(single_buffer_params):
        pm = {"pipeline_mode": pl.Buffered(1)} if single_buffer_params else {}
        return pl.pallas_call(
            ffw_kernel,
            out_shape=jax.ShapeDtypeStruct((N, H), x.dtype),
            grid_spec=pltpu.PrefetchScalarGridSpec(
                num_scalar_prefetch=0,
                grid=grid,
                in_specs=[
                    pl.BlockSpec((rt, H), lambda i: (i, 0)),       # x rows (tiled)
                    pl.BlockSpec((H, H), lambda i: (0, 0), **pm),  # W1^T (resident)
                    pl.BlockSpec((1, H), lambda i: (0, 0), **pm),  # b1
                    pl.BlockSpec((H, H), lambda i: (0, 0), **pm),  # W2^T (resident)
                    pl.BlockSpec((1, H), lambda i: (0, 0), **pm),  # b2
                ],
                out_specs=pl.BlockSpec((rt, H), lambda i: (i, 0)),
            ),
            compiler_params=pltpu.CompilerParams(
                dimension_semantics=("parallel",),  # shard row tiles across TCs
                vmem_limit_bytes=vmem_limit,
            ),
        )

    try:
        out = _build(True)(xr, w1t, b1r, w2t, b2r)
    except Exception:
        # JAX without BlockSpec(pipeline_mode=...) support: fall back to the
        # default double buffering (2x resident-param VMEM, same numerics).
        out = _build(False)(xr, w1t, b1r, w2t, b2r)

    return out.reshape(B, S, H)


def _reference(x, w1, b1, w2, b2):
    h = jnp.maximum(x @ w1.T + b1, 0.0)
    return h @ w2.T + b2 + x


if __name__ == "__main__":
    B, S, H = 2, 8, 32  # batch, seq, hidden_units
    key = jax.random.PRNGKey(0)
    kx, k1, k2, k3, k4 = jax.random.split(key, 5)

    x = jax.random.normal(kx, (B, S, H), dtype=jnp.float32)
    # nn.Linear-style init (weight (H, H), bias (H,))
    bound = 1.0 / (H ** 0.5)
    w1 = jax.random.uniform(k1, (H, H), minval=-bound, maxval=bound, dtype=jnp.float32)
    b1 = jax.random.uniform(k2, (H,), minval=-bound, maxval=bound, dtype=jnp.float32)
    w2 = jax.random.uniform(k3, (H, H), minval=-bound, maxval=bound, dtype=jnp.float32)
    b2 = jax.random.uniform(k4, (H,), minval=-bound, maxval=bound, dtype=jnp.float32)

    params = prepare_ffw_params(w1, b1, w2, b2, dtype=x.dtype)  # one-time prep
    out = ffw_unoff(x, params)
    out = jax.block_until_ready(out)

    ref = _reference(x, w1, b1, w2, b2)
    assert out.shape == (B, S, H)
    assert jnp.allclose(out, ref, atol=1e-5, rtol=1e-5), "mismatch vs reference"
    print("KERNEL_OK")
</pallas_src>

<mosaic_0001>
module attributes {stable_mosaic.version = 11 : i64} {
  func.func @ffw_kernel(%arg0: i32, %arg1: memref<8x32xf32, #tpu.memory_space<vmem>>, %arg2: memref<32x32xf32, #tpu.memory_space<vmem>>, %arg3: memref<1x32xf32, #tpu.memory_space<vmem>>, %arg4: memref<32x32xf32, #tpu.memory_space<vmem>>, %arg5: memref<1x32xf32, #tpu.memory_space<vmem>>, %arg6: memref<8x32xf32, #tpu.memory_space<vmem>>) attributes {dimension_semantics = [#tpu.dimension_semantics<parallel>], iteration_bounds = array<i64: 2>, scalar_prefetch = 0 : i64, scratch_operands = 0 : i64, tpu.core_type = #tpu.core_type<tc>, window_params = [{transform_indices = @transform_0, window_bounds = array<i64: 8, 32>}, {pipeline_mode = #tpu.pipeline_mode<synchronous>, transform_indices = @transform_1, window_bounds = array<i64: 32, 32>}, {pipeline_mode = #tpu.pipeline_mode<synchronous>, transform_indices = @transform_2, window_bounds = array<i64: 1, 32>}, {pipeline_mode = #tpu.pipeline_mode<synchronous>, transform_indices = @transform_3, window_bounds = array<i64: 32, 32>}, {pipeline_mode = #tpu.pipeline_mode<synchronous>, transform_indices = @transform_4, window_bounds = array<i64: 1, 32>}, {transform_indices = @transform_5, window_bounds = array<i64: 8, 32>}]} {
    %c0 = arith.constant 0 : index
    %c0_0 = arith.constant 0 : index
    %0 = vector.load %arg1[%c0, %c0_0] : memref<8x32xf32, #tpu.memory_space<vmem>>, vector<8x32xf32>
    %c0_1 = arith.constant 0 : index
    %c0_2 = arith.constant 0 : index
    %1 = vector.load %arg2[%c0_1, %c0_2] : memref<32x32xf32, #tpu.memory_space<vmem>>, vector<32x32xf32>
    %cst = arith.constant dense<0.000000e+00> : vector<8x32xf32>
    %2 = tpu.matmul %0, %1, %cst {dimension_numbers = #tpu.dot_dimension_numbers<[1], [0], [0], [1], [0, 0, 1, 1], [], []>} : vector<8x32xf32>, vector<32x32xf32>, vector<8x32xf32> -> vector<8x32xf32>
    %c0_3 = arith.constant 0 : index
    %c0_4 = arith.constant 0 : index
    %3 = vector.load %arg3[%c0_3, %c0_4] : memref<1x32xf32, #tpu.memory_space<vmem>>, vector<1x32xf32>
    %4 = vector.broadcast %3 : vector<1x32xf32> to vector<8x32xf32>
    %5 = arith.addf %2, %4 : vector<8x32xf32>
    %cst_5 = arith.constant 0.000000e+00 : f32
    %6 = vector.broadcast %cst_5 : f32 to vector<8x32xf32>
    %7 = arith.maximumf %5, %6 : vector<8x32xf32>
    %c0_6 = arith.constant 0 : index
    %c0_7 = arith.constant 0 : index
    %8 = vector.load %arg4[%c0_6, %c0_7] : memref<32x32xf32, #tpu.memory_space<vmem>>, vector<32x32xf32>
    %cst_8 = arith.constant dense<0.000000e+00> : vector<8x32xf32>
    %9 = tpu.matmul %7, %8, %cst_8 {dimension_numbers = #tpu.dot_dimension_numbers<[1], [0], [0], [1], [0, 0, 1, 1], [], []>} : vector<8x32xf32>, vector<32x32xf32>, vector<8x32xf32> -> vector<8x32xf32>
    %c0_9 = arith.constant 0 : index
    %c0_10 = arith.constant 0 : index
    %10 = vector.load %arg5[%c0_9, %c0_10] : memref<1x32xf32, #tpu.memory_space<vmem>>, vector<1x32xf32>
    %11 = vector.broadcast %10 : vector<1x32xf32> to vector<8x32xf32>
    %12 = arith.addf %9, %11 : vector<8x32xf32>
    %13 = arith.addf %12, %0 : vector<8x32xf32>
    %c0_11 = arith.constant 0 : index
    %c0_12 = arith.constant 0 : index
    %14 = vector.load %arg6[%c0_11, %c0_12] : memref<8x32xf32, #tpu.memory_space<vmem>>, vector<8x32xf32>
    tpu.vector_store %arg6[%c0_11, %c0_12], %13 {strides = array<i32>} : memref<8x32xf32, #tpu.memory_space<vmem>>, vector<8x32xf32>,
    return
  }
  func.func @transform_0(%arg0: i32) -> (i32, i32) {
    %c0_i32 = arith.constant 0 : i32
    %c0_i32_0 = arith.constant 0 : i32
    return %arg0, %c0_i32 : i32, i32
  }
  func.func @transform_1(%arg0: i32) -> (i32, i32) {
    %c0_i32 = arith.constant 0 : i32
    %c0_i32_0 = arith.constant 0 : i32
    %c0_i32_1 = arith.constant 0 : i32
    return %c0_i32, %c0_i32_0 : i32, i32
  }
  func.func @transform_2(%arg0: i32) -> (i32, i32) {
    %c0_i32 = arith.constant 0 : i32
    %c0_i32_0 = arith.constant 0 : i32
    %c0_i32_1 = arith.constant 0 : i32
    return %c0_i32, %c0_i32_0 : i32, i32
  }
  func.func @transform_3(%arg0: i32) -> (i32, i32) {
    %c0_i32 = arith.constant 0 : i32
    %c0_i32_0 = arith.constant 0 : i32
    %c0_i32_1 = arith.constant 0 : i32
    return %c0_i32, %c0_i32_0 : i32, i32
  }
  func.func @transform_4(%arg0: i32) -> (i32, i32) {
    %c0_i32 = arith.constant 0 : i32
    %c0_i32_0 = arith.constant 0 : i32
    %c0_i32_1 = arith.constant 0 : i32
    return %c0_i32, %c0_i32_0 : i32, i32
  }
  func.func @transform_5(%arg0: i32) -> (i32, i32) {
    %c0_i32 = arith.constant 0 : i32
    %c0_i32_0 = arith.constant 0 : i32
    return %arg0, %c0_i32 : i32, i32
  }
}

module attributes {stable_mosaic.version = 11 : i64} {
  func.func @ffw_kernel(%arg0: i32, %arg1: memref<8x32xf32, #tpu.memory_space<vmem>>, %arg2: memref<32x32xf32, #tpu.memory_space<vmem>>, %arg3: memref<1x32xf32, #tpu.memory_space<vmem>>, %arg4: memref<32x32xf32, #tpu.memory_space<vmem>>, %arg5: memref<1x32xf32, #tpu.memory_space<vmem>>, %arg6: memref<8x32xf32, #tpu.memory_space<vmem>>) attributes {dimension_semantics = [#tpu.dimension_semantics<parallel>], iteration_bounds = array<i64: 2>, scalar_prefetch = 0 : i64, scratch_operands = 0 : i64, tpu.core_type = #tpu.core_type<tc>, window_params = [{transform_indices = @transform_0, window_bounds = array<i64: 8, 32>}, {pipeline_mode = #tpu.pipeline_mode<synchronous>, transform_indices = @transform_1, window_bounds = array<i64: 32, 32>}, {pipeline_mode = #tpu.pipeline_mode<synchronous>, transform_indices = @transform_2, window_bounds = array<i64: 1, 32>}, {pipeline_mode = #tpu.pipeline_mode<synchronous>, transform_indices = @transform_3, window_bounds = array<i64: 32, 32>}, {pipeline_mode = #tpu.pipeline_mode<synchronous>, transform_indices = @transform_4, window_bounds = array<i64: 1, 32>}, {transform_indices = @transform_5, window_bounds = array<i64: 8, 32>}]} {
    %c0 = arith.constant 0 : index
    %c0_0 = arith.constant 0 : index
    %0 = vector.load %arg1[%c0, %c0_0] : memref<8x32xf32, #tpu.memory_space<vmem>>, vector<8x32xf32>
    %c0_1 = arith.constant 0 : index
    %c0_2 = arith.constant 0 : index
    %1 = vector.load %arg2[%c0_1, %c0_2] : memref<32x32xf32, #tpu.memory_space<vmem>>, vector<32x32xf32>
    %cst = arith.constant dense<0.000000e+00> : vector<8x32xf32>
    %2 = tpu.matmul %0, %1, %cst {dimension_numbers = #tpu.dot_dimension_numbers<[1], [0], [0], [1], [0, 0, 1, 1], [], []>} : vector<8x32xf32>, vector<32x32xf32>, vector<8x32xf32> -> vector<8x32xf32>
    %c0_3 = arith.constant 0 : index
    %c0_4 = arith.constant 0 : index
    %3 = vector.load %arg3[%c0_3, %c0_4] : memref<1x32xf32, #tpu.memory_space<vmem>>, vector<1x32xf32>
    %4 = vector.broadcast %3 : vector<1x32xf32> to vector<8x32xf32>
    %5 = arith.addf %2, %4 : vector<8x32xf32>
    %cst_5 = arith.constant 0.000000e+00 : f32
    %6 = vector.broadcast %cst_5 : f32 to vector<8x32xf32>
    %7 = arith.maximumf %5, %6 : vector<8x32xf32>
    %c0_6 = arith.constant 0 : index
    %c0_7 = arith.constant 0 : index
    %8 = vector.load %arg4[%c0_6, %c0_7] : memref<32x32xf32, #tpu.memory_space<vmem>>, vector<32x32xf32>
    %cst_8 = arith.constant dense<0.000000e+00> : vector<8x32xf32>
    %9 = tpu.matmul %7, %8, %cst_8 {dimension_numbers = #tpu.dot_dimension_numbers<[1], [0], [0], [1], [0, 0, 1, 1], [], []>} : vector<8x32xf32>, vector<32x32xf32>, vector<8x32xf32> -> vector<8x32xf32>
    %c0_9 = arith.constant 0 : index
    %c0_10 = arith.constant 0 : index
    %10 = vector.load %arg5[%c0_9, %c0_10] : memref<1x32xf32, #tpu.memory_space<vmem>>, vector<1x32xf32>
    %11 = vector.broadcast %10 : vector<1x32xf32> to vector<8x32xf32>
    %12 = arith.addf %9, %11 : vector<8x32xf32>
    %13 = arith.addf %12, %0 : vector<8x32xf32>
    %c0_11 = arith.constant 0 : index
    %c0_12 = arith.constant 0 : index
    %14 = vector.load %arg6[%c0_11, %c0_12] : memref<8x32xf32, #tpu.memory_space<vmem>>, vector<8x32xf32>
    tpu.vector_store %arg6[%c0_11, %c0_12], %13 {strides = array<i32>} : memref<8x32xf32, #tpu.memory_space<vmem>>, vector<8x32xf32>,
    return
  }
  func.func @transform_0(%arg0: i32) -> (i32, i32) {
    %c0_i32 = arith.constant 0 : i32
    %c0_i32_0 = arith.constant 0 : i32
    return %arg0, %c0_i32 : i32, i32
  }
  func.func @transform_1(%arg0: i32) -> (i32, i32) {
    %c0_i32 = arith.constant 0 : i32
    %c0_i32_0 = arith.constant 0 : i32
    %c0_i32_1 = arith.constant 0 : i32
    return %c0_i32, %c0_i32_0 : i32, i32
  }
  func.func @transform_2(%arg0: i32) -> (i32, i32) {
    %c0_i32 = arith.constant 0 : i32
    %c0_i32_0 = arith.constant 0 : i32
    %c0_i32_1 = arith.constant 0 : i32
    return %c0_i32, %c0_i32_0 : i32, i32
  }
  func.func @transform_3(%arg0: i32) -> (i32, i32) {
    %c0_i32 = arith.constant 0 : i32
    %c0_i32_0 = arith.constant 0 : i32
    %c0_i32_1 = arith.constant 0 : i32
    return %c0_i32, %c0_i32_0 : i32, i32
  }
  func.func @transform_4(%arg0: i32) -> (i32, i32) {
    %c0_i32 = arith.constant 0 : i32
    %c0_i32_0 = arith.constant 0 : i32
    %c0_i32_1 = arith.constant 0 : i32
    return %c0_i32, %c0_i32_0 : i32, i32
  }
  func.func @transform_5(%arg0: i32) -> (i32, i32) {
    %c0_i32 = arith.constant 0 : i32
    %c0_i32_0 = arith.constant 0 : i32
    return %arg0, %c0_i32 : i32, i32
  }
}

</mosaic_0001>

<llo_original>
// kernel: tpu_custom_call.1
$region0: #{tpu_custom_call.1}
  #allocation0 [shape = 'u32[]', space=smem, size = 0x4, offset = 0x4, fixed_abs, tag = 'smem constant byte address 0x4 - core index']
  #allocation1 [shape = 'u32[72,128]{1,0:T(1,128)}', space=vmem, size = 0x9000, scoped, tag = 'internal scratch']
  %s0 = inlined_call_operand.hbm [shape: f32[16,32], index: 0, kind: input, shape index: {}]
  %s1 = inlined_call_operand.hbm [shape: f32[32,32], index: 1, kind: input, shape index: {}]
  %s2 = inlined_call_operand.vmem [shape: f32[1,32], index: 2, kind: input, shape index: {}]
  %s3 = inlined_call_operand.hbm [shape: f32[32,32], index: 3, kind: input, shape index: {}]
  %s4 = inlined_call_operand.vmem [shape: f32[1,32], index: 4, kind: input, shape index: {}]
  %s5 = inlined_call_operand.hbm [shape: f32[16,32], index: 5, kind: output, shape index: {}]
  %s6 = sld [smem:[#allocation0]]
  $region65: #{tpu_custom_call.1} parent=0
    _
  %s8 = ssub.s32 1, %s6
  %s9 = scalar_select 0, %s8, %s6
  $region1: #{tpu_custom_call.1} parent=0
    #allocation2 [shape = 'u8[8192]{0}', space=vmem, size = 0x2000, scoped, tag = 'input window, operand 0']
    #allocation3 [shape = 's32[2]{0}', space=sflag, size = 0x8, scoped, tag = 'scoped memory for tpu_custom_call.1']
    #allocation4 [shape = 's32[2]{0}', space=sflag, size = 0x8, scoped, tag = 'scoped memory for tpu_custom_call.1']
    #allocation5 [shape = 'u8[16384]{0}', space=vmem, size = 0x4000, scoped, tag = 'input window, operand 1, single buffered']
    #allocation6 [shape = 's32[1]{0}', space=sflag, size = 0x4, scoped, tag = 'scoped memory for tpu_custom_call.1']
    #allocation7 [shape = 'u8[16384]{0}', space=vmem, size = 0x4000, scoped, tag = 'input window, operand 3, single buffered']
    #allocation8 [shape = 'u8[8192]{0}', space=vmem, size = 0x2000, scoped, tag = 'output window, operand 0']
    %10 = vsyncpa [#allocation3], 0
    %s11 = scalar_lea.sflag [#allocation3], 1
    %12 = vsyncpa %s11, 0
    %13 = vsyncpa [#allocation6], 0
    %14 = vsyncpa [#allocation4], 0
    %s15 = scalar_lea.sflag [#allocation4], 1
    %16 = vsyncpa %s15, 0
    loop: start=0, step=1, limit=4
    $region2: #{tpu_custom_call.1} parent=1 // loop_pre_header
      _
    $region3: #{tpu_custom_call.1} parent=1 // loop_header
      %s18 = sphi 0, %s22
      %p19 = scmp.ge.s32.totalorder %s18, 4
      %s28 = sphi 0, %s30
      %s31 = sphi 0, %s28
      %s32 = sphi 0, %s31
      %s48 = sphi 0, %s32
      %s52 = sphi 0, %s52
      %s54 = sphi 0, %s52
      %s55 = sphi 0, %s54
      %s69 = sphi 0, %s55
      %s73 = sphi 0, %s73
      %s75 = sphi 0, %s73
      %s76 = sphi 0, %s75
      %s90 = sphi 0, %s76
      %s94 = sphi 0, %s94
      %s96 = sphi 0, %s94
      %s97 = sphi 0, %s96
      %s111 = sphi 0, %s97
      %s115 = sphi 0, %s115
      %s117 = sphi 0, %s115
      %s118 = sphi 0, %s117
      %s132 = sphi 0, %s118
      %s138 = sphi 0, %s140
      %s141 = sphi 0, %s138
      %s142 = sphi 0, %s141
      %s158 = sphi 0, %s142
    $region4: #{tpu_custom_call.1} parent=1 // loop_header_branch
      %21 = sbr.rel (%p19) target = $region8
    $region5: #{tpu_custom_call.1} parent=1 // loop_body
      %s23 = ssub.s32 %s18, 1
      %s24 = ssub.s32 %s18, 2
      %s25 = sadd.s32 %s18, 1
      %s26 = ssub.s32 %s18, %s25
      %p27 = scmp.eq.s32.totalorder %s26, 0
      %s29 = sadd.s32 %s28, 1
      %s30 = scalar_select %p27, %s28, %s29
      %p33 = pneg %p27
      %p34 = scmp.eq.s32.totalorder %s18, 1
      %p35 = por %p33, %p34
      %p36 = scmp.ne.s32.totalorder %s28, %s31
      %p37 = scmp.eq.s32.totalorder %s18, 0
      %p38 = por %p36, %p37
      %p39 = scmp.ne.s32.totalorder %s28, %s31
      %p40 = scmp.eq.s32.totalorder %s23, 1
      %p41 = por %p39, %p40
      %p42 = scmp.ne.s32.totalorder %s31, %s32
      %p43 = scmp.eq.s32.totalorder %s23, 0
      %p44 = por %p42, %p43
      %p45 = scmp.ne.s32.totalorder %s31, %s32
      %p46 = scmp.eq.s32.totalorder %s24, 1
      %p47 = por %p45, %p46
      %p49 = scmp.ne.s32.totalorder %s32, %s48
      %p50 = scmp.eq.s32.totalorder %s24, 0
      %p51 = por %p49, %p50
      %s53 = sadd.s32 %s52, 1
      %p56 = scmp.eq.s32.totalorder %s18, 1
      %p57 = scmp.ne.s32.totalorder %s52, %s54
      %p58 = scmp.eq.s32.totalorder %s18, 0
      %p59 = por %p57, %p58
      %p60 = scmp.ne.s32.totalorder %s52, %s54
      %p61 = scmp.eq.s32.totalorder %s23, 1
      %p62 = por %p60, %p61
      %p63 = scmp.ne.s32.totalorder %s54, %s55
      %p64 = scmp.eq.s32.totalorder %s23, 0
      %p65 = por %p63, %p64
      %p66 = scmp.ne.s32.totalorder %s54, %s55
      %p67 = scmp.eq.s32.totalorder %s24, 1
      %p68 = por %p66, %p67
      %p70 = scmp.ne.s32.totalorder %s55, %s69
      %p71 = scmp.eq.s32.totalorder %s24, 0
      %p72 = por %p70, %p71
      %s74 = sadd.s32 %s73, 1
      %p77 = scmp.eq.s32.totalorder %s18, 1
      %p78 = scmp.ne.s32.totalorder %s73, %s75
      %p79 = scmp.eq.s32.totalorder %s18, 0
      %p80 = por %p78, %p79
      %p81 = scmp.ne.s32.totalorder %s73, %s75
      %p82 = scmp.eq.s32.totalorder %s23, 1
      %p83 = por %p81, %p82
      %p84 = scmp.ne.s32.totalorder %s75, %s76
      %p85 = scmp.eq.s32.totalorder %s23, 0
      %p86 = por %p84, %p85
      %p87 = scmp.ne.s32.totalorder %s75, %s76
      %p88 = scmp.eq.s32.totalorder %s24, 1
      %p89 = por %p87, %p88
      %p91 = scmp.ne.s32.totalorder %s76, %s90
      %p92 = scmp.eq.s32.totalorder %s24, 0
      %p93 = por %p91, %p92
      %s95 = sadd.s32 %s94, 1
      %p98 = scmp.eq.s32.totalorder %s18, 1
      %p99 = scmp.ne.s32.totalorder %s94, %s96
      %p100 = scmp.eq.s32.totalorder %s18, 0
      %p101 = por %p99, %p100
      %p102 = scmp.ne.s32.totalorder %s94, %s96
      %p103 = scmp.eq.s32.totalorder %s23, 1
      %p104 = por %p102, %p103
      %p105 = scmp.ne.s32.totalorder %s96, %s97
      %p106 = scmp.eq.s32.totalorder %s23, 0
      %p107 = por %p105, %p106
      %p108 = scmp.ne.s32.totalorder %s96, %s97
      %p109 = scmp.eq.s32.totalorder %s24, 1
      %p110 = por %p108, %p109
      %p112 = scmp.ne.s32.totalorder %s97, %s111
      %p113 = scmp.eq.s32.totalorder %s24, 0
      %p114 = por %p112, %p113
      %s116 = sadd.s32 %s115, 1
      %p119 = scmp.eq.s32.totalorder %s18, 1
      %p120 = scmp.ne.s32.totalorder %s115, %s117
      %p121 = scmp.eq.s32.totalorder %s18, 0
      %p122 = por %p120, %p121
      %p123 = scmp.ne.s32.totalorder %s115, %s117
      %p124 = scmp.eq.s32.totalorder %s23, 1
      %p125 = por %p123, %p124
      %p126 = scmp.ne.s32.totalorder %s117, %s118
      %p127 = scmp.eq.s32.totalorder %s23, 0
      %p128 = por %p126, %p127
      %p129 = scmp.ne.s32.totalorder %s117, %s118
      %p130 = scmp.eq.s32.totalorder %s24, 1
      %p131 = por %p129, %p130
      %p133 = scmp.ne.s32.totalorder %s118, %s132
      %p134 = scmp.eq.s32.totalorder %s24, 0
      %p135 = por %p133, %p134
      %s136 = ssub.s32 %s18, %s25
      %p137 = scmp.eq.s32.totalorder %s136, 0
      %s139 = sadd.s32 %s138, 1
      %s140 = scalar_select %p137, %s138, %s139
      %p143 = pneg %p137
      %p144 = scmp.eq.s32.totalorder %s18, 1
      %p145 = por %p143, %p144
      %p146 = scmp.ne.s32.totalorder %s138, %s141
      %p147 = scmp.eq.s32.totalorder %s18, 0
      %p148 = por %p146, %p147
      %p149 = scmp.ne.s32.totalorder %s138, %s141
      %p150 = scmp.eq.s32.totalorder %s23, 1
      %p151 = por %p149, %p150
      %p152 = scmp.ne.s32.totalorder %s141, %s142
      %p153 = scmp.eq.s32.totalorder %s23, 0
      %p154 = por %p152, %p153
      %p155 = scmp.ne.s32.totalorder %s141, %s142
      %p156 = scmp.eq.s32.totalorder %s24, 1
      %p157 = por %p155, %p156
      %p159 = scmp.ne.s32.totalorder %s142, %s158
      %p160 = scmp.eq.s32.totalorder %s24, 0
      %p161 = por %p159, %p160
      %p162 = scmp.le.s32.totalorder 1, %s18
      %p163 = scmp.lt.s32.totalorder %s18, 3
      %p164 = pnand %p162, %p163
      %p165 = pneg %p164
      // Predicated region
      $region9: #{tpu_custom_call.1} parent=5 // pred_check
        _
      $region10: #{tpu_custom_call.1} parent=5 // pred_check_branch
        %167 = sbr.rel (%p164) target = $region12
      $region11: #{tpu_custom_call.1} parent=5 // pred_region
        %s168 = ssub.s32 %s18, 1
        // Predicated region
        $region13: #{tpu_custom_call.1} parent=11 // pred_check
          %p169 = pneg %p65
        $region14: #{tpu_custom_call.1} parent=11 // pred_check_branch
          %171 = sbr.rel (%p169) target = $region16
        $region15: #{tpu_custom_call.1} parent=11 // pred_region
          %173 = vsyncadd [#allocation6], 0
          %s174 = sshll.u32 %s1, 4
          %s175 = int_to_ptr.hbm [resolvable:$true] %s174
          %s176 = sshll.u32 [#allocation5], 4
          %s177 = int_to_ptr.vmem [resolvable:$true] %s176
          %182 = dma.hbm_to_vmem [thread:$0]  %s175, 512, %s177, [#allocation6], 128, 128, 8
        $region16: #{tpu_custom_call.1} parent=11 // pred_fallthru
          _
        // Predicated region
        $region17: #{tpu_custom_call.1} parent=11 // pred_check
          %p183 = pneg %p86
        $region18: #{tpu_custom_call.1} parent=11 // pred_check_branch
          %185 = sbr.rel (%p183) target = $region20
        $region19: #{tpu_custom_call.1} parent=11 // pred_region
          _
        $region20: #{tpu_custom_call.1} parent=11 // pred_fallthru
          _
        // Predicated region
        $region21: #{tpu_custom_call.1} parent=11 // pred_check
          %p186 = pneg %p107
        $region22: #{tpu_custom_call.1} parent=11 // pred_check_branch
          %188 = sbr.rel (%p186) target = $region24
        $region23: #{tpu_custom_call.1} parent=11 // pred_region
          %190 = vsyncadd [#allocation6], 0
          %s191 = sshll.u32 %s3, 4
          %s192 = int_to_ptr.hbm [resolvable:$true] %s191
          %s193 = sshll.u32 [#allocation7], 4
          %s194 = int_to_ptr.vmem [resolvable:$true] %s193
          %199 = dma.hbm_to_vmem [thread:$0]  %s192, 512, %s194, [#allocation6], 128, 128, 8
        $region24: #{tpu_custom_call.1} parent=11 // pred_fallthru
          _
        // Predicated region
        $region25: #{tpu_custom_call.1} parent=11 // pred_check
          %p200 = pneg %p128
        $region26: #{tpu_custom_call.1} parent=11 // pred_check_branch
          %202 = sbr.rel (%p200) target = $region28
        $region27: #{tpu_custom_call.1} parent=11 // pred_region
          _
        $region28: #{tpu_custom_call.1} parent=11 // pred_fallthru
          _
      $region12: #{tpu_custom_call.1} parent=5 // pred_fallthru
        _
      %p203 = scmp.lt.s32.totalorder %s18, 2
      // Predicated region
      $region29: #{tpu_custom_call.1} parent=5 // pred_check
        %p204 = pneg %p203
      $region30: #{tpu_custom_call.1} parent=5 // pred_check_branch
        %206 = sbr.rel (%p204) target = $region32
      $region31: #{tpu_custom_call.1} parent=5 // pred_region
        // Predicated region
        $region33: #{tpu_custom_call.1} parent=31 // pred_check
          %p207 = pneg %p38
        $region34: #{tpu_custom_call.1} parent=31 // pred_check_branch
          %209 = sbr.rel (%p207) target = $region36
        $region35: #{tpu_custom_call.1} parent=31 // pred_region
          %s210 = sand.u32 %s28, 1
          %s211 = scalar_lea.sflag [#allocation3], %s210
          %s212 = sand.u32 %s28, 1
          %s213 = smul.addr %s212, 8
          %s214 = scalar_lea.vmem [#allocation2], %s213
          %216 = vsyncadd %s211, 0
          %s217 = smul.addr %s18, 8
          %s218 = scalar_lea.hbm %s0, %s217
          %s220 = sshll.u32 %s218, 4
          %s221 = int_to_ptr.hbm [resolvable:$true] %s220
          %s222 = sshll.u32 %s214, 4
          %s223 = int_to_ptr.vmem [resolvable:$true] %s222
          %225 = dma.hbm_to_vmem [thread:$0]  %s221, 128, %s223, %s211
        $region36: #{tpu_custom_call.1} parent=31 // pred_fallthru
          _
      $region32: #{tpu_custom_call.1} parent=5 // pred_fallthru
        _
      %p226 = scmp.le.s32.totalorder 1, %s18
      %p227 = scmp.lt.s32.totalorder %s18, 3
      %p228 = pnand %p226, %p227
      %p229 = pneg %p228
      // Predicated region
      $region37: #{tpu_custom_call.1} parent=5 // pred_check
        _
      $region38: #{tpu_custom_call.1} parent=5 // pred_check_branch
        %231 = sbr.rel (%p228) target = $region40
      $region39: #{tpu_custom_call.1} parent=5 // pred_region
        %s232 = ssub.s32 %s18, 1
        %s233 = sand.u32 %s31, 1
        %s234 = scalar_lea.sflag [#allocation3], %s233
        %s235 = sand.u32 %s31, 1
        %s236 = smul.addr %s235, 8
        %s237 = scalar_lea.vmem [#allocation2], %s236
        // Predicated region
        $region41: #{tpu_custom_call.1} parent=39 // pred_check
          %p238 = pneg %p44
        $region42: #{tpu_custom_call.1} parent=39 // pred_check_branch
          %240 = sbr.rel (%p238) target = $region44
        $region43: #{tpu_custom_call.1} parent=39 // pred_region
          %242 = dma.done %s234, 128
        $region44: #{tpu_custom_call.1} parent=39 // pred_fallthru
          _
        // Predicated region
        $region45: #{tpu_custom_call.1} parent=39 // pred_check
          %p243 = pneg %p65
        $region46: #{tpu_custom_call.1} parent=39 // pred_check_branch
          %245 = sbr.rel (%p243) target = $region48
        $region47: #{tpu_custom_call.1} parent=39 // pred_region
          %247 = dma.done [#allocation6], 512
        $region48: #{tpu_custom_call.1} parent=39 // pred_fallthru
          _
        // Predicated region
        $region49: #{tpu_custom_call.1} parent=39 // pred_check
          %p248 = pneg %p107
        $region50: #{tpu_custom_call.1} parent=39 // pred_check_branch
          %250 = sbr.rel (%p248) target = $region52
        $region51: #{tpu_custom_call.1} parent=39 // pred_region
          %252 = dma.done [#allocation6], 512
        $region52: #{tpu_custom_call.1} parent=39 // pred_fallthru
          _
        %s253 = sand.u32 %s31, 1
        %s254 = scalar_lea.sflag [#allocation3], %s253
        %s255 = sand.u32 %s31, 1
        %s256 = smul.addr %s255, 8
        %s257 = scalar_lea.vmem [#allocation2], %s256
        %p258 = pneg %p44
        %p259 = pneg %p41
        %p260 = pneg %p65
        %p261 = pneg %p62
        %p262 = pneg %p86
        %p263 = pneg %p83
        %p264 = pneg %p107
        %p265 = pneg %p104
        %p266 = pneg %p128
        %p267 = pneg %p125
        %p268 = pneg %p154
        %p269 = pneg %p151
        %s270 = sand.u32 %s141, 1
        %s271 = scalar_lea.sflag [#allocation4], %s270
        %s272 = sand.u32 %s141, 1
        %s273 = smul.addr %s272, 8
        %s274 = scalar_lea.vmem [#allocation8], %s273
        %v275 = vld [vmem:[%s237] sm:$0xff]
        %v276 = vld [vmem:[#allocation5] sm:$0xff]
        %v277 = vld [vmem:[#allocation5 + $0x8] sm:$0xff]
        %v278 = vld [vmem:[#allocation5 + $0x10] sm:$0xff]
        %v279 = vld [vmem:[#allocation5 + $0x18] sm:$0xff]
        %v280 = vld [vmem:[%s2] sm:$0x1]
        %v282 = vperm.slane %v280, 0
        %vm284 = vcmask 261120
        %v286 = vsel %vm284, %v275, 0
        %288 = vmatpush.msra.mxu0 0.0
        %289 = vmatpush.msra.mxu0 0.0
        %290 = vmatpush.msra.mxu0 0.0
        %291 = vmatpush.msra.mxu0 0.0
        %292 = vmatpush.msra.mxu0 0.0
        %293 = vmatpush.msra.mxu0 0.0
        %294 = vmatpush.msra.mxu0 0.0
        %295 = vmatpush.msra.mxu0 0.0
        %296 = vmatpush.msra.mxu0 0.0
        %297 = vmatpush.msra.mxu0 0.0
        %298 = vmatpush.msra.mxu0 0.0
        %299 = vmatpush.msra.mxu0 0.0
        %300 = vmatpush.msra.mxu0 %v279
        %301 = vmatpush.msra.mxu0 %v278
        %302 = vmatpush.msra.mxu0 %v277
        %303 = vmatpush.msra.mxu0 %v276
        %304 = vmatmul.f32.gmra.mxu0 %v286
        %v305 = vpop.f32.mrf.mxu0
        %v306 = vadd.f32 %v282, %v305
        %307 = vdwg.mxu0
        %v308 = vmax.f32 %v306, 0.0
        %v309 = vld [vmem:[#allocation7] sm:$0xff]
        %v310 = vld [vmem:[#allocation7 + $0x8] sm:$0xff]
        %v311 = vld [vmem:[#allocation7 + $0x10] sm:$0xff]
        %v312 = vld [vmem:[#allocation7 + $0x18] sm:$0xff]
        %v313 = vld [vmem:[%s4] sm:$0x1]
        %v315 = vperm.slane %v313, 0
        %v318 = vsel %vm284, %v308, 0
        %320 = vmatpush.msra.mxu0 0.0
        %321 = vmatpush.msra.mxu0 0.0
        %322 = vmatpush.msra.mxu0 0.0
        %323 = vmatpush.msra.mxu0 0.0
        %324 = vmatpush.msra.mxu0 0.0
        %325 = vmatpush.msra.mxu0 0.0
        %326 = vmatpush.msra.mxu0 0.0
        %327 = vmatpush.msra.mxu0 0.0
        %328 = vmatpush.msra.mxu0 0.0
        %329 = vmatpush.msra.mxu0 0.0
        %330 = vmatpush.msra.mxu0 0.0
        %331 = vmatpush.msra.mxu0 0.0
        %332 = vmatpush.msra.mxu0 %v312
        %333 = vmatpush.msra.mxu0 %v311
        %334 = vmatpush.msra.mxu0 %v310
        %335 = vmatpush.msra.mxu0 %v309
        %336 = vmatmul.f32.gmra.mxu0 %v318
        %v337 = vpop.f32.mrf.mxu0
        %v338 = vadd.f32 %v315, %v337
        %339 = vdwg.mxu0
        %v340 = vadd.f32 %v338, %v275
        %341 = vst.msk [vmem:[%s274] sm:$0xff] %vm284, %v340
        %s342 = sand.u32 %s141, 1
        %s343 = scalar_lea.sflag [#allocation4], %s342
        %s344 = sand.u32 %s141, 1
        %s345 = smul.addr %s344, 8
        %s346 = scalar_lea.vmem [#allocation8], %s345
        // Predicated region
        $region53: #{tpu_custom_call.1} parent=39 // pred_check
          %p347 = pneg %p151
        $region54: #{tpu_custom_call.1} parent=39 // pred_check_branch
          %349 = sbr.rel (%p347) target = $region56
        $region55: #{tpu_custom_call.1} parent=39 // pred_region
          %351 = vsyncadd %s343, 0
          %s352 = smul.addr %s23, 8
          %s353 = scalar_lea.hbm %s5, %s352
          %s355 = sshll.u32 %s346, 4
          %s356 = int_to_ptr.vmem [resolvable:$true] %s355
          %s357 = sshll.u32 %s353, 4
          %s358 = int_to_ptr.hbm [resolvable:$true] %s357
          %360 = dma.vmem_to_hbm [thread:$0]  %s356, 128, %s358, %s343
        $region56: #{tpu_custom_call.1} parent=39 // pred_fallthru
          _
      $region40: #{tpu_custom_call.1} parent=5 // pred_fallthru
        _
      %p361 = scmp.le.s32.totalorder 2, %s18
      // Predicated region
      $region57: #{tpu_custom_call.1} parent=5 // pred_check
        %p362 = pneg %p361
      $region58: #{tpu_custom_call.1} parent=5 // pred_check_branch
        %364 = sbr.rel (%p362) target = $region60
      $region59: #{tpu_custom_call.1} parent=5 // pred_region
        %s365 = ssub.s32 %s18, 2
        // Predicated region
        $region61: #{tpu_custom_call.1} parent=59 // pred_check
          %p366 = pneg %p157
        $region62: #{tpu_custom_call.1} parent=59 // pred_check_branch
          %368 = sbr.rel (%p366) target = $region64
        $region63: #{tpu_custom_call.1} parent=59 // pred_region
          %s369 = sand.u32 %s142, 1
          %s370 = scalar_lea.sflag [#allocation4], %s369
          %s371 = sand.u32 %s142, 1
          %s372 = smul.addr %s371, 8
          %s373 = scalar_lea.vmem [#allocation8], %s372
          %375 = dma.done %s370, 128
        $region64: #{tpu_custom_call.1} parent=59 // pred_fallthru
          _
      $region60: #{tpu_custom_call.1} parent=5 // pred_fallthru
        _
    $region6: #{tpu_custom_call.1} parent=1 // loop_footer
      %s22 = sadd.s32 1, %s18
    $region7: #{tpu_custom_call.1} parent=1 // loop_footer_branch
      %17 = sbr.rel target = $region3
    $region8: #{tpu_custom_call.1} parent=1 // loop_exit
      _
    %376 = vsyncpa [#allocation3], 1
    %s377 = scalar_lea.sflag [#allocation3], 1
    %378 = vsyncpa %s377, 1
    %379 = vsyncpa [#allocation6], 1
    %380 = vsyncpa [#allocation4], 1
    %s381 = scalar_lea.sflag [#allocation4], 1
    %382 = vsyncpa %s381, 1

// kernel: tpu_custom_call.1
$region0: #{tpu_custom_call.1}
  #allocation0 [shape = 'u32[]', space=smem, size = 0x4, offset = 0x4, fixed_abs, tag = 'smem constant byte address 0x4 - core index']
  #allocation1 [shape = 'u32[72,128]{1,0:T(1,128)}', space=vmem, size = 0x9000, scoped, tag = 'internal scratch']
  %s0 = inlined_call_operand.hbm [shape: f32[16,32], index: 0, kind: input, shape index: {}]
  %s1 = inlined_call_operand.hbm [shape: f32[32,32], index: 1, kind: input, shape index: {}]
  %s2 = inlined_call_operand.vmem [shape: f32[1,32], index: 2, kind: input, shape index: {}]
  %s3 = inlined_call_operand.hbm [shape: f32[32,32], index: 3, kind: input, shape index: {}]
  %s4 = inlined_call_operand.vmem [shape: f32[1,32], index: 4, kind: input, shape index: {}]
  %s5 = inlined_call_operand.hbm [shape: f32[16,32], index: 5, kind: output, shape index: {}]
  %s6 = sld [smem:[#allocation0]]
  $region65: #{tpu_custom_call.1} parent=0
    _
  %s8 = ssub.s32 1, %s6
  %s9 = scalar_select 0, %s8, %s6
  $region1: #{tpu_custom_call.1} parent=0
    #allocation2 [shape = 'u8[8192]{0}', space=vmem, size = 0x2000, scoped, tag = 'input window, operand 0']
    #allocation3 [shape = 's32[2]{0}', space=sflag, size = 0x8, scoped, tag = 'scoped memory for tpu_custom_call.1']
    #allocation4 [shape = 's32[2]{0}', space=sflag, size = 0x8, scoped, tag = 'scoped memory for tpu_custom_call.1']
    #allocation5 [shape = 'u8[16384]{0}', space=vmem, size = 0x4000, scoped, tag = 'input window, operand 1, single buffered']
    #allocation6 [shape = 's32[1]{0}', space=sflag, size = 0x4, scoped, tag = 'scoped memory for tpu_custom_call.1']
    #allocation7 [shape = 'u8[16384]{0}', space=vmem, size = 0x4000, scoped, tag = 'input window, operand 3, single buffered']
    #allocation8 [shape = 'u8[8192]{0}', space=vmem, size = 0x2000, scoped, tag = 'output window, operand 0']
    %10 = vsyncpa [#allocation3], 0
    %s11 = scalar_lea.sflag [#allocation3], 1
    %12 = vsyncpa %s11, 0
    %13 = vsyncpa [#allocation6], 0
    %14 = vsyncpa [#allocation4], 0
    %s15 = scalar_lea.sflag [#allocation4], 1
    %16 = vsyncpa %s15, 0
    loop: start=0, step=1, limit=4
    $region2: #{tpu_custom_call.1} parent=1 // loop_pre_header
      _
    $region3: #{tpu_custom_call.1} parent=1 // loop_header
      %s18 = sphi 0, %s22
      %p19 = scmp.ge.s32.totalorder %s18, 4
      %s28 = sphi 0, %s30
      %s31 = sphi 0, %s28
      %s32 = sphi 0, %s31
      %s48 = sphi 0, %s32
      %s52 = sphi 0, %s52
      %s54 = sphi 0, %s52
      %s55 = sphi 0, %s54
      %s69 = sphi 0, %s55
      %s73 = sphi 0, %s73
      %s75 = sphi 0, %s73
      %s76 = sphi 0, %s75
      %s90 = sphi 0, %s76
      %s94 = sphi 0, %s94
      %s96 = sphi 0, %s94
      %s97 = sphi 0, %s96
      %s111 = sphi 0, %s97
      %s115 = sphi 0, %s115
      %s117 = sphi 0, %s115
      %s118 = sphi 0, %s117
      %s132 = sphi 0, %s118
      %s138 = sphi 0, %s140
      %s141 = sphi 0, %s138
      %s142 = sphi 0, %s141
      %s158 = sphi 0, %s142
    $region4: #{tpu_custom_call.1} parent=1 // loop_header_branch
      %21 = sbr.rel (%p19) target = $region8
    $region5: #{tpu_custom_call.1} parent=1 // loop_body
      %s23 = ssub.s32 %s18, 1
      %s24 = ssub.s32 %s18, 2
      %s25 = sadd.s32 %s18, 1
      %s26 = ssub.s32 %s18, %s25
      %p27 = scmp.eq.s32.totalorder %s26, 0
      %s29 = sadd.s32 %s28, 1
      %s30 = scalar_select %p27, %s28, %s29
      %p33 = pneg %p27
      %p34 = scmp.eq.s32.totalorder %s18, 1
      %p35 = por %p33, %p34
      %p36 = scmp.ne.s32.totalorder %s28, %s31
      %p37 = scmp.eq.s32.totalorder %s18, 0
      %p38 = por %p36, %p37
      %p39 = scmp.ne.s32.totalorder %s28, %s31
      %p40 = scmp.eq.s32.totalorder %s23, 1
      %p41 = por %p39, %p40
      %p42 = scmp.ne.s32.totalorder %s31, %s32
      %p43 = scmp.eq.s32.totalorder %s23, 0
      %p44 = por %p42, %p43
      %p45 = scmp.ne.s32.totalorder %s31, %s32
      %p46 = scmp.eq.s32.totalorder %s24, 1
      %p47 = por %p45, %p46
      %p49 = scmp.ne.s32.totalorder %s32, %s48
      %p50 = scmp.eq.s32.totalorder %s24, 0
      %p51 = por %p49, %p50
      %s53 = sadd.s32 %s52, 1
      %p56 = scmp.eq.s32.totalorder %s18, 1
      %p57 = scmp.ne.s32.totalorder %s52, %s54
      %p58 = scmp.eq.s32.totalorder %s18, 0
      %p59 = por %p57, %p58
      %p60 = scmp.ne.s32.totalorder %s52, %s54
      %p61 = scmp.eq.s32.totalorder %s23, 1
      %p62 = por %p60, %p61
      %p63 = scmp.ne.s32.totalorder %s54, %s55
      %p64 = scmp.eq.s32.totalorder %s23, 0
      %p65 = por %p63, %p64
      %p66 = scmp.ne.s32.totalorder %s54, %s55
      %p67 = scmp.eq.s32.totalorder %s24, 1
      %p68 = por %p66, %p67
      %p70 = scmp.ne.s32.totalorder %s55, %s69
      %p71 = scmp.eq.s32.totalorder %s24, 0
      %p72 = por %p70, %p71
      %s74 = sadd.s32 %s73, 1
      %p77 = scmp.eq.s32.totalorder %s18, 1
      %p78 = scmp.ne.s32.totalorder %s73, %s75
      %p79 = scmp.eq.s32.totalorder %s18, 0
      %p80 = por %p78, %p79
      %p81 = scmp.ne.s32.totalorder %s73, %s75
      %p82 = scmp.eq.s32.totalorder %s23, 1
      %p83 = por %p81, %p82
      %p84 = scmp.ne.s32.totalorder %s75, %s76
      %p85 = scmp.eq.s32.totalorder %s23, 0
      %p86 = por %p84, %p85
      %p87 = scmp.ne.s32.totalorder %s75, %s76
      %p88 = scmp.eq.s32.totalorder %s24, 1
      %p89 = por %p87, %p88
      %p91 = scmp.ne.s32.totalorder %s76, %s90
      %p92 = scmp.eq.s32.totalorder %s24, 0
      %p93 = por %p91, %p92
      %s95 = sadd.s32 %s94, 1
      %p98 = scmp.eq.s32.totalorder %s18, 1
      %p99 = scmp.ne.s32.totalorder %s94, %s96
      %p100 = scmp.eq.s32.totalorder %s18, 0
      %p101 = por %p99, %p100
      %p102 = scmp.ne.s32.totalorder %s94, %s96
      %p103 = scmp.eq.s32.totalorder %s23, 1
      %p104 = por %p102, %p103
      %p105 = scmp.ne.s32.totalorder %s96, %s97
      %p106 = scmp.eq.s32.totalorder %s23, 0
      %p107 = por %p105, %p106
      %p108 = scmp.ne.s32.totalorder %s96, %s97
      %p109 = scmp.eq.s32.totalorder %s24, 1
      %p110 = por %p108, %p109
      %p112 = scmp.ne.s32.totalorder %s97, %s111
      %p113 = scmp.eq.s32.totalorder %s24, 0
      %p114 = por %p112, %p113
      %s116 = sadd.s32 %s115, 1
      %p119 = scmp.eq.s32.totalorder %s18, 1
      %p120 = scmp.ne.s32.totalorder %s115, %s117
      %p121 = scmp.eq.s32.totalorder %s18, 0
      %p122 = por %p120, %p121
      %p123 = scmp.ne.s32.totalorder %s115, %s117
      %p124 = scmp.eq.s32.totalorder %s23, 1
      %p125 = por %p123, %p124
      %p126 = scmp.ne.s32.totalorder %s117, %s118
      %p127 = scmp.eq.s32.totalorder %s23, 0
      %p128 = por %p126, %p127
      %p129 = scmp.ne.s32.totalorder %s117, %s118
      %p130 = scmp.eq.s32.totalorder %s24, 1
      %p131 = por %p129, %p130
      %p133 = scmp.ne.s32.totalorder %s118, %s132
      %p134 = scmp.eq.s32.totalorder %s24, 0
      %p135 = por %p133, %p134
      %s136 = ssub.s32 %s18, %s25
      %p137 = scmp.eq.s32.totalorder %s136, 0
      %s139 = sadd.s32 %s138, 1
      %s140 = scalar_select %p137, %s138, %s139
      %p143 = pneg %p137
      %p144 = scmp.eq.s32.totalorder %s18, 1
      %p145 = por %p143, %p144
      %p146 = scmp.ne.s32.totalorder %s138, %s141
      %p147 = scmp.eq.s32.totalorder %s18, 0
      %p148 = por %p146, %p147
      %p149 = scmp.ne.s32.totalorder %s138, %s141
      %p150 = scmp.eq.s32.totalorder %s23, 1
      %p151 = por %p149, %p150
      %p152 = scmp.ne.s32.totalorder %s141, %s142
      %p153 = scmp.eq.s32.totalorder %s23, 0
      %p154 = por %p152, %p153
      %p155 = scmp.ne.s32.totalorder %s141, %s142
      %p156 = scmp.eq.s32.totalorder %s24, 1
      %p157 = por %p155, %p156
      %p159 = scmp.ne.s32.totalorder %s142, %s158
      %p160 = scmp.eq.s32.totalorder %s24, 0
      %p161 = por %p159, %p160
      %p162 = scmp.le.s32.totalorder 1, %s18
      %p163 = scmp.lt.s32.totalorder %s18, 3
      %p164 = pnand %p162, %p163
      %p165 = pneg %p164
      // Predicated region
      $region9: #{tpu_custom_call.1} parent=5 // pred_check
        _
      $region10: #{tpu_custom_call.1} parent=5 // pred_check_branch
        %167 = sbr.rel (%p164) target = $region12
      $region11: #{tpu_custom_call.1} parent=5 // pred_region
        %s168 = ssub.s32 %s18, 1
        // Predicated region
        $region13: #{tpu_custom_call.1} parent=11 // pred_check
          %p169 = pneg %p65
        $region14: #{tpu_custom_call.1} parent=11 // pred_check_branch
          %171 = sbr.rel (%p169) target = $region16
        $region15: #{tpu_custom_call.1} parent=11 // pred_region
          %173 = vsyncadd [#allocation6], 0
          %s174 = sshll.u32 %s1, 4
          %s175 = int_to_ptr.hbm [resolvable:$true] %s174
          %s176 = sshll.u32 [#allocation5], 4
          %s177 = int_to_ptr.vmem [resolvable:$true] %s176
          %182 = dma.hbm_to_vmem [thread:$0]  %s175, 512, %s177, [#allocation6], 128, 128, 8
        $region16: #{tpu_custom_call.1} parent=11 // pred_fallthru
          _
        // Predicated region
        $region17: #{tpu_custom_call.1} parent=11 // pred_check
          %p183 = pneg %p86
        $region18: #{tpu_custom_call.1} parent=11 // pred_check_branch
          %185 = sbr.rel (%p183) target = $region20
        $region19: #{tpu_custom_call.1} parent=11 // pred_region
          _
        $region20: #{tpu_custom_call.1} parent=11 // pred_fallthru
          _
        // Predicated region
        $region21: #{tpu_custom_call.1} parent=11 // pred_check
          %p186 = pneg %p107
        $region22: #{tpu_custom_call.1} parent=11 // pred_check_branch
          %188 = sbr.rel (%p186) target = $region24
        $region23: #{tpu_custom_call.1} parent=11 // pred_region
          %190 = vsyncadd [#allocation6], 0
          %s191 = sshll.u32 %s3, 4
          %s192 = int_to_ptr.hbm [resolvable:$true] %s191
          %s193 = sshll.u32 [#allocation7], 4
          %s194 = int_to_ptr.vmem [resolvable:$true] %s193
          %199 = dma.hbm_to_vmem [thread:$0]  %s192, 512, %s194, [#allocation6], 128, 128, 8
        $region24: #{tpu_custom_call.1} parent=11 // pred_fallthru
          _
        // Predicated region
        $region25: #{tpu_custom_call.1} parent=11 // pred_check
          %p200 = pneg %p128
        $region26: #{tpu_custom_call.1} parent=11 // pred_check_branch
          %202 = sbr.rel (%p200) target = $region28
        $region27: #{tpu_custom_call.1} parent=11 // pred_region
          _
        $region28: #{tpu_custom_call.1} parent=11 // pred_fallthru
          _
      $region12: #{tpu_custom_call.1} parent=5 // pred_fallthru
        _
      %p203 = scmp.lt.s32.totalorder %s18, 2
      // Predicated region
      $region29: #{tpu_custom_call.1} parent=5 // pred_check
        %p204 = pneg %p203
      $region30: #{tpu_custom_call.1} parent=5 // pred_check_branch
        %206 = sbr.rel (%p204) target = $region32
      $region31: #{tpu_custom_call.1} parent=5 // pred_region
        // Predicated region
        $region33: #{tpu_custom_call.1} parent=31 // pred_check
          %p207 = pneg %p38
        $region34: #{tpu_custom_call.1} parent=31 // pred_check_branch
          %209 = sbr.rel (%p207) target = $region36
        $region35: #{tpu_custom_call.1} parent=31 // pred_region
          %s210 = sand.u32 %s28, 1
          %s211 = scalar_lea.sflag [#allocation3], %s210
          %s212 = sand.u32 %s28, 1
          %s213 = smul.addr %s212, 8
          %s214 = scalar_lea.vmem [#allocation2], %s213
          %216 = vsyncadd %s211, 0
          %s217 = smul.addr %s18, 8
          %s218 = scalar_lea.hbm %s0, %s217
          %s220 = sshll.u32 %s218, 4
          %s221 = int_to_ptr.hbm [resolvable:$true] %s220
          %s222 = sshll.u32 %s214, 4
          %s223 = int_to_ptr.vmem [resolvable:$true] %s222
          %225 = dma.hbm_to_vmem [thread:$0]  %s221, 128, %s223, %s211
        $region36: #{tpu_custom_call.1} parent=31 // pred_fallthru
          _
      $region32: #{tpu_custom_call.1} parent=5 // pred_fallthru
        _
      %p226 = scmp.le.s32.totalorder 1, %s18
      %p227 = scmp.lt.s32.totalorder %s18, 3
      %p228 = pnand %p226, %p227
      %p229 = pneg %p228
      // Predicated region
      $region37: #{tpu_custom_call.1} parent=5 // pred_check
        _
      $region38: #{tpu_custom_call.1} parent=5 // pred_check_branch
        %231 = sbr.rel (%p228) target = $region40
      $region39: #{tpu_custom_call.1} parent=5 // pred_region
        %s232 = ssub.s32 %s18, 1
        %s233 = sand.u32 %s31, 1
        %s234 = scalar_lea.sflag [#allocation3], %s233
        %s235 = sand.u32 %s31, 1
        %s236 = smul.addr %s235, 8
        %s237 = scalar_lea.vmem [#allocation2], %s236
        // Predicated region
        $region41: #{tpu_custom_call.1} parent=39 // pred_check
          %p238 = pneg %p44
        $region42: #{tpu_custom_call.1} parent=39 // pred_check_branch
          %240 = sbr.rel (%p238) target = $region44
        $region43: #{tpu_custom_call.1} parent=39 // pred_region
          %242 = dma.done %s234, 128
        $region44: #{tpu_custom_call.1} parent=39 // pred_fallthru
          _
        // Predicated region
        $region45: #{tpu_custom_call.1} parent=39 // pred_check
          %p243 = pneg %p65
        $region46: #{tpu_custom_call.1} parent=39 // pred_check_branch
          %245 = sbr.rel (%p243) target = $region48
        $region47: #{tpu_custom_call.1} parent=39 // pred_region
          %247 = dma.done [#allocation6], 512
        $region48: #{tpu_custom_call.1} parent=39 // pred_fallthru
          _
        // Predicated region
        $region49: #{tpu_custom_call.1} parent=39 // pred_check
          %p248 = pneg %p107
        $region50: #{tpu_custom_call.1} parent=39 // pred_check_branch
          %250 = sbr.rel (%p248) target = $region52
        $region51: #{tpu_custom_call.1} parent=39 // pred_region
          %252 = dma.done [#allocation6], 512
        $region52: #{tpu_custom_call.1} parent=39 // pred_fallthru
          _
        %s253 = sand.u32 %s31, 1
        %s254 = scalar_lea.sflag [#allocation3], %s253
        %s255 = sand.u32 %s31, 1
        %s256 = smul.addr %s255, 8
        %s257 = scalar_lea.vmem [#allocation2], %s256
        %p258 = pneg %p44
        %p259 = pneg %p41
        %p260 = pneg %p65
        %p261 = pneg %p62
        %p262 = pneg %p86
        %p263 = pneg %p83
        %p264 = pneg %p107
        %p265 = pneg %p104
        %p266 = pneg %p128
        %p267 = pneg %p125
        %p268 = pneg %p154
        %p269 = pneg %p151
        %s270 = sand.u32 %s141, 1
        %s271 = scalar_lea.sflag [#allocation4], %s270
        %s272 = sand.u32 %s141, 1
        %s273 = smul.addr %s272, 8
        %s274 = scalar_lea.vmem [#allocation8], %s273
        %v275 = vld [vmem:[%s237] sm:$0xff]
        %v276 = vld [vmem:[#allocation5] sm:$0xff]
        %v277 = vld [vmem:[#allocation5 + $0x8] sm:$0xff]
        %v278 = vld [vmem:[#allocation5 + $0x10] sm:$0xff]
        %v279 = vld [vmem:[#allocation5 + $0x18] sm:$0xff]
        %v280 = vld [vmem:[%s2] sm:$0x1]
        %v282 = vperm.slane %v280, 0
        %vm284 = vcmask 261120
        %v286 = vsel %vm284, %v275, 0
        %288 = vmatpush.msra.mxu0 0.0
        %289 = vmatpush.msra.mxu0 0.0
        %290 = vmatpush.msra.mxu0 0.0
        %291 = vmatpush.msra.mxu0 0.0
        %292 = vmatpush.msra.mxu0 0.0
        %293 = vmatpush.msra.mxu0 0.0
        %294 = vmatpush.msra.mxu0 0.0
        %295 = vmatpush.msra.mxu0 0.0
        %296 = vmatpush.msra.mxu0 0.0
        %297 = vmatpush.msra.mxu0 0.0
        %298 = vmatpush.msra.mxu0 0.0
        %299 = vmatpush.msra.mxu0 0.0
        %300 = vmatpush.msra.mxu0 %v279
        %301 = vmatpush.msra.mxu0 %v278
        %302 = vmatpush.msra.mxu0 %v277
        %303 = vmatpush.msra.mxu0 %v276
        %304 = vmatmul.f32.gmra.mxu0 %v286
        %v305 = vpop.f32.mrf.mxu0
        %v306 = vadd.f32 %v282, %v305
        %307 = vdwg.mxu0
        %v308 = vmax.f32 %v306, 0.0
        %v309 = vld [vmem:[#allocation7] sm:$0xff]
        %v310 = vld [vmem:[#allocation7 + $0x8] sm:$0xff]
        %v311 = vld [vmem:[#allocation7 + $0x10] sm:$0xff]
        %v312 = vld [vmem:[#allocation7 + $0x18] sm:$0xff]
        %v313 = vld [vmem:[%s4] sm:$0x1]
        %v315 = vperm.slane %v313, 0
        %v318 = vsel %vm284, %v308, 0
        %320 = vmatpush.msra.mxu0 0.0
        %321 = vmatpush.msra.mxu0 0.0
        %322 = vmatpush.msra.mxu0 0.0
        %323 = vmatpush.msra.mxu0 0.0
        %324 = vmatpush.msra.mxu0 0.0
        %325 = vmatpush.msra.mxu0 0.0
        %326 = vmatpush.msra.mxu0 0.0
        %327 = vmatpush.msra.mxu0 0.0
        %328 = vmatpush.msra.mxu0 0.0
        %329 = vmatpush.msra.mxu0 0.0
        %330 = vmatpush.msra.mxu0 0.0
        %331 = vmatpush.msra.mxu0 0.0
        %332 = vmatpush.msra.mxu0 %v312
        %333 = vmatpush.msra.mxu0 %v311
        %334 = vmatpush.msra.mxu0 %v310
        %335 = vmatpush.msra.mxu0 %v309
        %336 = vmatmul.f32.gmra.mxu0 %v318
        %v337 = vpop.f32.mrf.mxu0
        %v338 = vadd.f32 %v315, %v337
        %339 = vdwg.mxu0
        %v340 = vadd.f32 %v338, %v275
        %341 = vst.msk [vmem:[%s274] sm:$0xff] %vm284, %v340
        %s342 = sand.u32 %s141, 1
        %s343 = scalar_lea.sflag [#allocation4], %s342
        %s344 = sand.u32 %s141, 1
        %s345 = smul.addr %s344, 8
        %s346 = scalar_lea.vmem [#allocation8], %s345
        // Predicated region
        $region53: #{tpu_custom_call.1} parent=39 // pred_check
          %p347 = pneg %p151
        $region54: #{tpu_custom_call.1} parent=39 // pred_check_branch
          %349 = sbr.rel (%p347) target = $region56
        $region55: #{tpu_custom_call.1} parent=39 // pred_region
          %351 = vsyncadd %s343, 0
          %s352 = smul.addr %s23, 8
          %s353 = scalar_lea.hbm %s5, %s352
          %s355 = sshll.u32 %s346, 4
          %s356 = int_to_ptr.vmem [resolvable:$true] %s355
          %s357 = sshll.u32 %s353, 4
          %s358 = int_to_ptr.hbm [resolvable:$true] %s357
          %360 = dma.vmem_to_hbm [thread:$0]  %s356, 128, %s358, %s343
        $region56: #{tpu_custom_call.1} parent=39 // pred_fallthru
          _
      $region40: #{tpu_custom_call.1} parent=5 // pred_fallthru
        _
      %p361 = scmp.le.s32.totalorder 2, %s18
      // Predicated region
      $region57: #{tpu_custom_call.1} parent=5 // pred_check
        %p362 = pneg %p361
      $region58: #{tpu_custom_call.1} parent=5 // pred_check_branch
        %364 = sbr.rel (%p362) target = $region60
      $region59: #{tpu_custom_call.1} parent=5 // pred_region
        %s365 = ssub.s32 %s18, 2
        // Predicated region
        $region61: #{tpu_custom_call.1} parent=59 // pred_check
          %p366 = pneg %p157
        $region62: #{tpu_custom_call.1} parent=59 // pred_check_branch
          %368 = sbr.rel (%p366) target = $region64
        $region63: #{tpu_custom_call.1} parent=59 // pred_region
          %s369 = sand.u32 %s142, 1
          %s370 = scalar_lea.sflag [#allocation4], %s369
          %s371 = sand.u32 %s142, 1
          %s372 = smul.addr %s371, 8
          %s373 = scalar_lea.vmem [#allocation8], %s372
          %375 = dma.done %s370, 128
        $region64: #{tpu_custom_call.1} parent=59 // pred_fallthru
          _
      $region60: #{tpu_custom_call.1} parent=5 // pred_fallthru
        _
    $region6: #{tpu_custom_call.1} parent=1 // loop_footer
      %s22 = sadd.s32 1, %s18
    $region7: #{tpu_custom_call.1} parent=1 // loop_footer_branch
      %17 = sbr.rel target = $region3
    $region8: #{tpu_custom_call.1} parent=1 // loop_exit
      _
    %376 = vsyncpa [#allocation3], 1
    %s377 = scalar_lea.sflag [#allocation3], 1
    %378 = vsyncpa %s377, 1
    %379 = vsyncpa [#allocation6], 1
    %380 = vsyncpa [#allocation4], 1
    %s381 = scalar_lea.sflag [#allocation4], 1
    %382 = vsyncpa %s381, 1

</llo_original>
